<compile_context>
chip_gen: v6e
topology: v6e:2x2x1
jax: 0.10.0
libtpu: 0.0.40
codegen_flags: <defaults>
</compile_context>

<pallas_src>
import functools

import jax
import jax.numpy as jnp
from jax.experimental import pallas as pl
from jax.experimental.pallas import tpu as pltpu


def _round_up(n, m):
    return ((n + m - 1) // m) * m


def _param_offsets(state_space, hidden):
    """Row offsets (all multiples of 8) of each parameter inside the packed buffer."""
    s8 = _round_up(state_space, 8)
    offs = {
        "w1": 0,                       # (state_space, hidden)
        "b1": s8,                      # 1 row
        "w2": s8 + 8,                  # (hidden, hidden)
        "b2": s8 + 8 + hidden,         # 1 row
        "w3": s8 + 16 + hidden,        # (hidden, hidden), cols >= action_space are zero
        "b3": s8 + 16 + 2 * hidden,    # 1 row
        "sig": s8 + 24 + 2 * hidden,   # 1 row (raw sigma parameter)
    }
    total_rows = s8 + 32 + 2 * hidden
    return offs, total_rows


def _stable_softplus(x):
    # Numerically stable softplus, matches torch.nn.functional.softplus.
    return jnp.maximum(x, 0.0) + jnp.log1p(jnp.exp(-jnp.abs(x)))


def _orthogonal(key, rows, cols, dtype=jnp.float32):
    """Deterministic orthogonal init (mirrors torch.nn.init.orthogonal_ semantics)."""
    big, small = max(rows, cols), min(rows, cols)
    a = jax.random.normal(key, (big, small), dtype=jnp.float32)
    q, r = jnp.linalg.qr(a)
    q = q * jnp.sign(jnp.diagonal(r))[None, :]   # sign correction, like torch
    if rows < cols:
        q = q.T
    return q.astype(dtype)


def make_actor_params(key, state_space, action_space, hidden=64):
    """Builds the packed parameter buffer plus raw params for the reference check."""
    assert action_space <= hidden, "packing assumes action_space <= hidden"
    k1, k2, k3 = jax.random.split(key, 3)
    # PyTorch Linear weight is (out, in); we keep the transpose (in, out).
    w1t = _orthogonal(k1, hidden, state_space).T        # (S, H)
    w2t = _orthogonal(k2, hidden, hidden).T             # (H, H)
    w3t = _orthogonal(k3, action_space, hidden).T       # (H, A)
    b1 = jnp.zeros((hidden,), jnp.float32)               # torch.nn.init.zeros_
    b2 = jnp.zeros((hidden,), jnp.float32)
    b3 = jnp.zeros((action_space,), jnp.float32)
    sigma_param = jnp.full((action_space,), 0.5, jnp.float32)  # zeros + init_sigma

    offs, rows = _param_offsets(state_space, hidden)
    buf = jnp.zeros((rows, hidden), jnp.float32)
    buf = buf.at[0:state_space, :].set(w1t)
    buf = buf.at[offs["b1"], :].set(b1)
    buf = buf.at[offs["w2"]:offs["w2"] + hidden, :].set(w2t)
    buf = buf.at[offs["b2"], :].set(b2)
    buf = buf.at[offs["w3"]:offs["w3"] + hidden, 0:action_space].set(w3t)
    buf = buf.at[offs["b3"], 0:action_space].set(b3)
    buf = buf.at[offs["sig"], 0:action_space].set(sigma_param)

    raw = (w1t, b1, w2t, b2, w3t, b3, sigma_param)
    return buf, raw


def actor_kernel(x_ref, p_ref, mean_ref, sigma_ref, *,
                 state_space, hidden, action_space):
    offs, _ = _param_offsets(state_space, hidden)
    s, h, a = state_space, hidden, action_space

    # Static slices into the single packed parameter buffer (already in VMEM,
    # all row offsets are 8-aligned so the slices are sublane-aligned).
    w1 = p_ref[0:s, :]                           # (S, H)
    b1 = p_ref[offs["b1"]:offs["b1"] + 1, :]     # (1, H)
    w2 = p_ref[offs["w2"]:offs["w2"] + h, :]     # (H, H)
    b2 = p_ref[offs["b2"]:offs["b2"] + 1, :]     # (1, H)
    w3 = p_ref[offs["w3"]:offs["w3"] + h, :]     # (H, H), cols >= A are zero
    b3 = p_ref[offs["b3"]:offs["b3"] + 1, :]     # (1, H), entries >= A are zero
    sg = p_ref[offs["sig"]:offs["sig"] + 1, :]   # (1, H), raw sigma parameter

    x = x_ref[...]
    h1 = jnp.tanh(jnp.dot(x, w1, preferred_element_type=jnp.float32) + b1)
    h2 = jnp.tanh(jnp.dot(h1, w2, preferred_element_type=jnp.float32) + b2)
    mean_full = jnp.dot(h2, w3, preferred_element_type=jnp.float32) + b3   # (TB, H)
    mean_ref[...] = mean_full[:, :a]

    # Sigma head: softplus of the raw sigma parameter (state independent, tiny).
    # Each grid step writes its own 8-row block (sublane aligned, parallel-safe);
    # the wrapper returns row 0.
    sigma = _stable_softplus(sg[:, :a])          # (1, A)
    sigma_ref[...] = jnp.broadcast_to(sigma, (8, a))


@functools.partial(jax.jit, static_argnames=("action_space",))
def actor_forward(x, packed_params, *, action_space):
    batch, state_space = x.shape
    rows, hidden = packed_params.shape
    _, expect_rows = _param_offsets(state_space, hidden)
    assert rows == expect_rows, "packed parameter buffer has unexpected layout"

    # Batch tile: full batch when small; 256-row tiles (MXU friendly) when large.
    tb = batch if batch <= 256 else 256
    n_blocks = pl.cdiv(batch, tb)

    kernel = functools.partial(
        actor_kernel,
        state_space=state_space, hidden=hidden, action_space=action_space)

    mean, sigma = pl.pallas_call(
        kernel,
        out_shape=(
            jax.ShapeDtypeStruct((batch, action_space), jnp.float32),
            jax.ShapeDtypeStruct((8 * n_blocks, action_space), jnp.float32),
        ),
        grid=(n_blocks,),
        in_specs=[
            pl.BlockSpec((tb, state_space), lambda i: (i, 0)),
            # Constant block index -> parameters are DMA'd into VMEM only once.
            pl.BlockSpec((rows, hidden), lambda i: (0, 0)),
        ],
        out_specs=(
            pl.BlockSpec((tb, action_space), lambda i: (i, 0)),
            pl.BlockSpec((8, action_space), lambda i: (i, 0)),
        ),
        compiler_params=pltpu.CompilerParams(
            dimension_semantics=("parallel",)),   # shard batch tiles across TCs (v7x)
    )(x, packed_params)
    return mean, sigma[0]


def actor_reference(x, raw):
    w1t, b1, w2t, b2, w3t, b3, sigma_param = raw
    hp = jax.lax.Precision.HIGHEST
    h1 = jnp.tanh(jnp.dot(x, w1t, precision=hp) + b1)
    h2 = jnp.tanh(jnp.dot(h1, w2t, precision=hp) + b2)
    mean = jnp.dot(h2, w3t, precision=hp) + b3
    sigma = _stable_softplus(sigma_param)
    return mean, sigma


if __name__ == "__main__":
    key = jax.random.PRNGKey(0)
    k_x, k_p = jax.random.split(key)

    batch = 8
    state_space = 16
    action_space = 3
    hidden = 64

    x = jax.random.normal(k_x, (batch, state_space), dtype=jnp.float32)
    packed, raw = make_actor_params(k_p, state_space, action_space, hidden)

    mean, sigma = actor_forward(x, packed, action_space=action_space)
    jax.block_until_ready((mean, sigma))

    ref_mean, ref_sigma = actor_reference(x, raw)
    assert mean.shape == (batch, action_space)
    assert sigma.shape == (action_space,)
    assert jnp.allclose(mean, ref_mean, atol=1e-5, rtol=1e-5)
    assert jnp.allclose(sigma, ref_sigma, atol=1e-6, rtol=1e-6)

    print("KERNEL_OK")
</pallas_src>

<mosaic_0001>
module attributes {stable_mosaic.version = 11 : i64} {
  func.func @actor_kernel(%arg0: i32, %arg1: memref<8x16xf32, #tpu.memory_space<vmem>>, %arg2: memref<176x64xf32, #tpu.memory_space<vmem>>, %arg3: memref<8x3xf32, #tpu.memory_space<vmem>>, %arg4: memref<8x3xf32, #tpu.memory_space<vmem>>) attributes {dimension_semantics = [#tpu.dimension_semantics<parallel>], iteration_bounds = array<i64: 1>, scalar_prefetch = 0 : i64, scratch_operands = 0 : i64, tpu.core_type = #tpu.core_type<tc>, window_params = [{transform_indices = @transform_0, window_bounds = array<i64: 8, 16>}, {pipeline_mode = #tpu.pipeline_mode<synchronous>, transform_indices = @transform_1, window_bounds = array<i64: 176, 64>}, {transform_indices = @transform_2, window_bounds = array<i64: 8, 3>}, {transform_indices = @transform_3, window_bounds = array<i64: 8, 3>}]} {
    %c0 = arith.constant 0 : index
    %c0_0 = arith.constant 0 : index
    %0 = vector.load %arg2[%c0, %c0_0] : memref<176x64xf32, #tpu.memory_space<vmem>>, vector<16x64xf32>
    %c16 = arith.constant 16 : index
    %c0_1 = arith.constant 0 : index
    %1 = vector.load %arg2[%c16, %c0_1] : memref<176x64xf32, #tpu.memory_space<vmem>>, vector<1x64xf32>
    %c24 = arith.constant 24 : index
    %c0_2 = arith.constant 0 : index
    %2 = vector.load %arg2[%c24, %c0_2] : memref<176x64xf32, #tpu.memory_space<vmem>>, vector<64x64xf32>
    %c88 = arith.constant 88 : index
    %c0_3 = arith.constant 0 : index
    %3 = vector.load %arg2[%c88, %c0_3] : memref<176x64xf32, #tpu.memory_space<vmem>>, vector<1x64xf32>
    %c96 = arith.constant 96 : index
    %c0_4 = arith.constant 0 : index
    %4 = vector.load %arg2[%c96, %c0_4] : memref<176x64xf32, #tpu.memory_space<vmem>>, vector<64x64xf32>
    %c160 = arith.constant 160 : index
    %c0_5 = arith.constant 0 : index
    %5 = vector.load %arg2[%c160, %c0_5] : memref<176x64xf32, #tpu.memory_space<vmem>>, vector<1x64xf32>
    %c168 = arith.constant 168 : index
    %c0_6 = arith.constant 0 : index
    %6 = vector.load %arg2[%c168, %c0_6] : memref<176x64xf32, #tpu.memory_space<vmem>>, vector<1x64xf32>
    %c0_7 = arith.constant 0 : index
    %c0_8 = arith.constant 0 : index
    %7 = vector.load %arg1[%c0_7, %c0_8] : memref<8x16xf32, #tpu.memory_space<vmem>>, vector<8x16xf32>
    %cst = arith.constant dense<0.000000e+00> : vector<8x64xf32>
    %8 = tpu.matmul %7, %0, %cst {dimension_numbers = #tpu.dot_dimension_numbers<[1], [0], [0], [1], [0, 0, 1, 1], [], []>} : vector<8x16xf32>, vector<16x64xf32>, vector<8x64xf32> -> vector<8x64xf32>
    %9 = vector.broadcast %1 : vector<1x64xf32> to vector<8x64xf32>
    %10 = arith.addf %8, %9 : vector<8x64xf32>
    %11 = math.tanh %10 : vector<8x64xf32>
    %cst_9 = arith.constant dense<0.000000e+00> : vector<8x64xf32>
    %12 = tpu.matmul %11, %2, %cst_9 {dimension_numbers = #tpu.dot_dimension_numbers<[1], [0], [0], [1], [0, 0, 1, 1], [], []>} : vector<8x64xf32>, vector<64x64xf32>, vector<8x64xf32> -> vector<8x64xf32>
    %13 = vector.broadcast %3 : vector<1x64xf32> to vector<8x64xf32>
    %14 = arith.addf %12, %13 : vector<8x64xf32>
    %15 = math.tanh %14 : vector<8x64xf32>
    %cst_10 = arith.constant dense<0.000000e+00> : vector<8x64xf32>
    %16 = tpu.matmul %15, %4, %cst_10 {dimension_numbers = #tpu.dot_dimension_numbers<[1], [0], [0], [1], [0, 0, 1, 1], [], []>} : vector<8x64xf32>, vector<64x64xf32>, vector<8x64xf32> -> vector<8x64xf32>
    %17 = vector.broadcast %5 : vector<1x64xf32> to vector<8x64xf32>
    %18 = arith.addf %16, %17 : vector<8x64xf32>
    %19 = vector.extract_strided_slice %18 {offsets = [0, 0], sizes = [8, 3], strides = [1, 1]} : vector<8x64xf32> to vector<8x3xf32>
    %c0_11 = arith.constant 0 : index
    %c0_12 = arith.constant 0 : index
    %20 = vector.load %arg3[%c0_11, %c0_12] : memref<8x3xf32, #tpu.memory_space<vmem>>, vector<8x3xf32>
    tpu.vector_store %arg3[%c0_11, %c0_12], %19 {strides = array<i32>} : memref<8x3xf32, #tpu.memory_space<vmem>>, vector<8x3xf32>,
    %21 = vector.extract_strided_slice %6 {offsets = [0, 0], sizes = [1, 3], strides = [1, 1]} : vector<1x64xf32> to vector<1x3xf32>
    %cst_13 = arith.constant 0.000000e+00 : f32
    %22 = vector.broadcast %cst_13 : f32 to vector<1x3xf32>
    %23 = arith.maximumf %21, %22 : vector<1x3xf32>
    %24 = math.absf %21 : vector<1x3xf32>
    %cst_14 = arith.constant 0.000000e+00 : f32
    %25 = vector.broadcast %cst_14 : f32 to vector<1x3xf32>
    %26 = arith.subf %25, %24 : vector<1x3xf32>
    %27 = math.exp %26 : vector<1x3xf32>
    %28 = math.log1p %27 : vector<1x3xf32>
    %29 = arith.addf %23, %28 : vector<1x3xf32>
    %30 = vector.shape_cast %29 : vector<1x3xf32> to vector<1x3xf32>
    %31 = vector.broadcast %30 : vector<1x3xf32> to vector<8x3xf32>
    %c0_15 = arith.constant 0 : index
    %c0_16 = arith.constant 0 : index
    %32 = vector.load %arg4[%c0_15, %c0_16] : memref<8x3xf32, #tpu.memory_space<vmem>>, vector<8x3xf32>
    tpu.vector_store %arg4[%c0_15, %c0_16], %31 {strides = array<i32>} : memref<8x3xf32, #tpu.memory_space<vmem>>, vector<8x3xf32>,
    return
  }
  func.func @transform_0(%arg0: i32) -> (i32, i32) {
    %c0_i32 = arith.constant 0 : i32
    %c0_i32_0 = arith.constant 0 : i32
    return %arg0, %c0_i32 : i32, i32
  }
  func.func @transform_1(%arg0: i32) -> (i32, i32) {
    %c0_i32 = arith.constant 0 : i32
    %c0_i32_0 = arith.constant 0 : i32
    %c0_i32_1 = arith.constant 0 : i32
    return %c0_i32, %c0_i32_0 : i32, i32
  }
  func.func @transform_2(%arg0: i32) -> (i32, i32) {
    %c0_i32 = arith.constant 0 : i32
    %c0_i32_0 = arith.constant 0 : i32
    return %arg0, %c0_i32 : i32, i32
  }
  func.func @transform_3(%arg0: i32) -> (i32, i32) {
    %c0_i32 = arith.constant 0 : i32
    %c0_i32_0 = arith.constant 0 : i32
    return %arg0, %c0_i32 : i32, i32
  }
}

</mosaic_0001>

<llo_original>
// kernel: actor_forward.1
$region0: #{actor_forward.1}
  #allocation0 [shape = 'u32[]', space=smem, size = 0x4, offset = 0x4, fixed_abs, tag = 'smem constant byte address 0x4 - core index']
  #allocation1 [shape = 'u32[144,128]{1,0:T(1,128)}', space=vmem, size = 0x12000, scoped, tag = 'internal scratch']
  %s0 = inlined_call_operand.vmem [shape: f32[8,16], index: 0, kind: input, shape index: {}]
  %s1 = inlined_call_operand.vmem [shape: f32[176,64], index: 1, kind: input, shape index: {}]
  %s2 = inlined_call_operand.vmem [shape: f32[8,3], index: 2, kind: output, shape index: {0}]
  %s3 = inlined_call_operand.vmem [shape: f32[8,3], index: 3, kind: output, shape index: {1}]
  %4 = xla_tuple %s2, %s3
  %s5 = sld [smem:[#allocation0]]
  $region26: #{actor_forward.1} parent=0
    _
  %s7 = ssub.s32 1, %s5
  %s8 = scalar_select 0, %s7, %s5
  // Predicated region
  $region2: #{actor_forward.1} parent=0 // pred_check
    _
  $region3: #{actor_forward.1} parent=0 // pred_check_branch
    %10 = sbr.rel (0) target = $region5
  $region4: #{actor_forward.1} parent=0 // pred_region
    _
  $region5: #{actor_forward.1} parent=0 // pred_fallthru
    _
  // Predicated region
  $region6: #{actor_forward.1} parent=0 // pred_check
    _
  $region7: #{actor_forward.1} parent=0 // pred_check_branch
    %12 = sbr.rel (0) target = $region9
  $region8: #{actor_forward.1} parent=0 // pred_region
    _
  $region9: #{actor_forward.1} parent=0 // pred_fallthru
    _
  %v13 = vld [vmem:[%s1] sm:$0xff]
  %v14 = vld [vmem:[%s1 + $0x8] sm:$0xff]
  %v15 = vld [vmem:[%s1 + $0x10] sm:$0x1]
  %v16 = vld [vmem:[%s1 + $0x18] sm:$0xff]
  %v17 = vld [vmem:[%s1 + $0x20] sm:$0xff]
  %v18 = vld [vmem:[%s1 + $0x28] sm:$0xff]
  %v19 = vld [vmem:[%s1 + $0x30] sm:$0xff]
  %v20 = vld [vmem:[%s1 + $0x38] sm:$0xff]
  %v21 = vld [vmem:[%s1 + $0x40] sm:$0xff]
  %v22 = vld [vmem:[%s1 + $0x48] sm:$0xff]
  %v23 = vld [vmem:[%s1 + $0x50] sm:$0xff]
  %v24 = vld [vmem:[%s1 + $0x58] sm:$0x1]
  %v25 = vld [vmem:[%s1 + $0x60] sm:$0xff]
  %v26 = vld [vmem:[%s1 + $0x68] sm:$0xff]
  %v27 = vld [vmem:[%s1 + $0x70] sm:$0xff]
  %v28 = vld [vmem:[%s1 + $0x78] sm:$0xff]
  %v29 = vld [vmem:[%s1 + $0x80] sm:$0xff]
  %v30 = vld [vmem:[%s1 + $0x88] sm:$0xff]
  %v31 = vld [vmem:[%s1 + $0x90] sm:$0xff]
  %v32 = vld [vmem:[%s1 + $0x98] sm:$0xff]
  %v33 = vld [vmem:[%s1 + $0xa0] sm:$0x1]
  %v34 = vld [vmem:[%s1 + $0xa8] sm:$0x1]
  %v35 = vld [vmem:[%s0] sm:$0xff]
  %v36 = vlaneseq
  %v37 = vshrl.u32 %v36, 7
  %v38 = vsub.s32 0, %v37
  %v39 = vrot.slane %v15, %v38
  %vm40 = vcmask 130048
  %v42 = vsel %vm40, %v35, 0
  %44 = vmatprep.subr.mxu0 0.0
  %45 = vmatpush1.msra.mxu0 0.0
  %46 = vmatprep.subr.mxu0 0.0
  %47 = vmatpush1.msra.mxu0 0.0
  %48 = vmatprep.subr.mxu0 0.0
  %49 = vmatpush1.msra.mxu0 0.0
  %50 = vmatprep.subr.mxu0 0.0
  %51 = vmatpush1.msra.mxu0 0.0
  %52 = vmatprep.subr.mxu0 0.0
  %53 = vmatpush1.msra.mxu0 0.0
  %54 = vmatprep.subr.mxu0 0.0
  %55 = vmatpush1.msra.mxu0 0.0
  %56 = vmatprep.subr.mxu0 0.0
  %57 = vmatpush1.msra.mxu0 0.0
  %58 = vmatprep.subr.mxu0 0.0
  %59 = vmatpush1.msra.mxu0 0.0
  %60 = vmatprep.subr.mxu0 0.0
  %61 = vmatpush1.msra.mxu0 0.0
  %62 = vmatprep.subr.mxu0 0.0
  %63 = vmatpush1.msra.mxu0 0.0
  %64 = vmatprep.subr.mxu0 0.0
  %65 = vmatpush1.msra.mxu0 0.0
  %66 = vmatprep.subr.mxu0 0.0
  %67 = vmatpush1.msra.mxu0 0.0
  %68 = vmatprep.subr.mxu0 0.0
  %69 = vmatpush1.msra.mxu0 0.0
  %70 = vmatprep.subr.mxu0 0.0
  %71 = vmatpush1.msra.mxu0 0.0
  %72 = vmatprep.subr.mxu0 0.0
  %73 = vmatpush1.msra.mxu0 %v14
  %74 = vmatprep.subr.mxu0 0.0
  %75 = vmatpush1.msra.mxu0 %v13
  %76 = vmatprep.subr.mxu0 0.0
  %77 = vmatpush2.msra.mxu0 0.0
  %78 = vmatprep.subr.mxu0 0.0
  %79 = vmatpush2.msra.mxu0 0.0
  %80 = vmatprep.subr.mxu0 0.0
  %81 = vmatpush2.msra.mxu0 0.0
  %82 = vmatprep.subr.mxu0 0.0
  %83 = vmatpush2.msra.mxu0 0.0
  %84 = vmatprep.subr.mxu0 0.0
  %85 = vmatpush2.msra.mxu0 0.0
  %86 = vmatprep.subr.mxu0 0.0
  %87 = vmatpush2.msra.mxu0 0.0
  %88 = vmatprep.subr.mxu0 0.0
  %89 = vmatpush2.msra.mxu0 0.0
  %90 = vmatprep.subr.mxu0 0.0
  %91 = vmatpush2.msra.mxu0 0.0
  %92 = vmatprep.subr.mxu0 0.0
  %93 = vmatpush2.msra.mxu0 0.0
  %94 = vmatprep.subr.mxu0 0.0
  %95 = vmatpush2.msra.mxu0 0.0
  %96 = vmatprep.subr.mxu0 0.0
  %97 = vmatpush2.msra.mxu0 0.0
  %98 = vmatprep.subr.mxu0 0.0
  %99 = vmatpush2.msra.mxu0 0.0
  %100 = vmatprep.subr.mxu0 0.0
  %101 = vmatpush2.msra.mxu0 0.0
  %102 = vmatprep.subr.mxu0 0.0
  %103 = vmatpush2.msra.mxu0 0.0
  %104 = vmatprep.subr.mxu0 0.0
  %105 = vmatpush2.msra.mxu0 0.0
  %106 = vmatprep.subr.mxu0 0.0
  %107 = vmatpush2.msra.mxu0 0.0
  %108 = vmatprep.mubr.f32.mxu0 0.0
  %109 = vmatmul.mubr.f32.gmra.mxu0 %v42
  %v110 = vpop.f32.mrf.mxu0
  %v111 = vadd.f32 %v39, %v110
  %v112 = vpop.f32.mrf.mxu0
  %113 = vdwg.mxu0
  %v114 = vtanh.pop %v111
  %v115 = vlaneseq
  %v116 = vshrl.u32 %v115, 7
  %v117 = vsub.s32 0, %v116
  %v118 = vrot.slane %v24, %v117
  %vm119 = vcmask 523264
  %v121 = vsel %vm119, %v114, 0
  %123 = vmatprep.subr.mxu0 0.0
  %124 = vmatpush1.msra.mxu0 0.0
  %125 = vmatprep.subr.mxu0 0.0
  %126 = vmatpush1.msra.mxu0 0.0
  %127 = vmatprep.subr.mxu0 0.0
  %128 = vmatpush1.msra.mxu0 0.0
  %129 = vmatprep.subr.mxu0 0.0
  %130 = vmatpush1.msra.mxu0 0.0
  %131 = vmatprep.subr.mxu0 0.0
  %132 = vmatpush1.msra.mxu0 0.0
  %133 = vmatprep.subr.mxu0 0.0
  %134 = vmatpush1.msra.mxu0 0.0
  %135 = vmatprep.subr.mxu0 0.0
  %136 = vmatpush1.msra.mxu0 0.0
  %137 = vmatprep.subr.mxu0 0.0
  %138 = vmatpush1.msra.mxu0 0.0
  %139 = vmatprep.subr.mxu0 0.0
  %140 = vmatpush1.msra.mxu0 %v23
  %141 = vmatprep.subr.mxu0 0.0
  %142 = vmatpush1.msra.mxu0 %v22
  %143 = vmatprep.subr.mxu0 0.0
  %144 = vmatpush1.msra.mxu0 %v21
  %145 = vmatprep.subr.mxu0 0.0
  %146 = vmatpush1.msra.mxu0 %v20
  %147 = vmatprep.subr.mxu0 0.0
  %148 = vmatpush1.msra.mxu0 %v19
  %149 = vmatprep.subr.mxu0 0.0
  %150 = vmatpush1.msra.mxu0 %v18
  %151 = vmatprep.subr.mxu0 0.0
  %152 = vmatpush1.msra.mxu0 %v17
  %153 = vmatprep.subr.mxu0 0.0
  %154 = vmatpush1.msra.mxu0 %v16
  %155 = vmatprep.subr.mxu0 0.0
  %156 = vmatpush2.msra.mxu0 0.0
  %157 = vmatprep.subr.mxu0 0.0
  %158 = vmatpush2.msra.mxu0 0.0
  %159 = vmatprep.subr.mxu0 0.0
  %160 = vmatpush2.msra.mxu0 0.0
  %161 = vmatprep.subr.mxu0 0.0
  %162 = vmatpush2.msra.mxu0 0.0
  %163 = vmatprep.subr.mxu0 0.0
  %164 = vmatpush2.msra.mxu0 0.0
  %165 = vmatprep.subr.mxu0 0.0
  %166 = vmatpush2.msra.mxu0 0.0
  %167 = vmatprep.subr.mxu0 0.0
  %168 = vmatpush2.msra.mxu0 0.0
  %169 = vmatprep.subr.mxu0 0.0
  %170 = vmatpush2.msra.mxu0 0.0
  %171 = vmatprep.subr.mxu0 0.0
  %172 = vmatpush2.msra.mxu0 0.0
  %173 = vmatprep.subr.mxu0 0.0
  %174 = vmatpush2.msra.mxu0 0.0
  %175 = vmatprep.subr.mxu0 0.0
  %176 = vmatpush2.msra.mxu0 0.0
  %177 = vmatprep.subr.mxu0 0.0
  %178 = vmatpush2.msra.mxu0 0.0
  %179 = vmatprep.subr.mxu0 0.0
  %180 = vmatpush2.msra.mxu0 0.0
  %181 = vmatprep.subr.mxu0 0.0
  %182 = vmatpush2.msra.mxu0 0.0
  %183 = vmatprep.subr.mxu0 0.0
  %184 = vmatpush2.msra.mxu0 0.0
  %185 = vmatprep.subr.mxu0 0.0
  %186 = vmatpush2.msra.mxu0 0.0
  %187 = vmatprep.mubr.f32.mxu0 0.0
  %188 = vmatmul.mubr.f32.gmra.mxu0 %v121
  %v189 = vpop.f32.mrf.mxu0
  %v190 = vadd.f32 %v118, %v189
  %v191 = vpop.f32.mrf.mxu0
  %192 = vdwg.mxu0
  %v193 = vtanh.pop %v190
  %v194 = vlaneseq
  %v195 = vshrl.u32 %v194, 7
  %v196 = vsub.s32 0, %v195
  %v197 = vrot.slane %v33, %v196
  %v199 = vsel %vm119, %v193, 0
  %201 = vmatprep.subr.mxu0 0.0
  %202 = vmatpush1.msra.mxu0 0.0
  %203 = vmatprep.subr.mxu0 0.0
  %204 = vmatpush1.msra.mxu0 0.0
  %205 = vmatprep.subr.mxu0 0.0
  %206 = vmatpush1.msra.mxu0 0.0
  %207 = vmatprep.subr.mxu0 0.0
  %208 = vmatpush1.msra.mxu0 0.0
  %209 = vmatprep.subr.mxu0 0.0
  %210 = vmatpush1.msra.mxu0 0.0
  %211 = vmatprep.subr.mxu0 0.0
  %212 = vmatpush1.msra.mxu0 0.0
  %213 = vmatprep.subr.mxu0 0.0
  %214 = vmatpush1.msra.mxu0 0.0
  %215 = vmatprep.subr.mxu0 0.0
  %216 = vmatpush1.msra.mxu0 0.0
  %217 = vmatprep.subr.mxu0 0.0
  %218 = vmatpush1.msra.mxu0 %v32
  %219 = vmatprep.subr.mxu0 0.0
  %220 = vmatpush1.msra.mxu0 %v31
  %221 = vmatprep.subr.mxu0 0.0
  %222 = vmatpush1.msra.mxu0 %v30
  %223 = vmatprep.subr.mxu0 0.0
  %224 = vmatpush1.msra.mxu0 %v29
  %225 = vmatprep.subr.mxu0 0.0
  %226 = vmatpush1.msra.mxu0 %v28
  %227 = vmatprep.subr.mxu0 0.0
  %228 = vmatpush1.msra.mxu0 %v27
  %229 = vmatprep.subr.mxu0 0.0
  %230 = vmatpush1.msra.mxu0 %v26
  %231 = vmatprep.subr.mxu0 0.0
  %232 = vmatpush1.msra.mxu0 %v25
  %233 = vmatprep.subr.mxu0 0.0
  %234 = vmatpush2.msra.mxu0 0.0
  %235 = vmatprep.subr.mxu0 0.0
  %236 = vmatpush2.msra.mxu0 0.0
  %237 = vmatprep.subr.mxu0 0.0
  %238 = vmatpush2.msra.mxu0 0.0
  %239 = vmatprep.subr.mxu0 0.0
  %240 = vmatpush2.msra.mxu0 0.0
  %241 = vmatprep.subr.mxu0 0.0
  %242 = vmatpush2.msra.mxu0 0.0
  %243 = vmatprep.subr.mxu0 0.0
  %244 = vmatpush2.msra.mxu0 0.0
  %245 = vmatprep.subr.mxu0 0.0
  %246 = vmatpush2.msra.mxu0 0.0
  %247 = vmatprep.subr.mxu0 0.0
  %248 = vmatpush2.msra.mxu0 0.0
  %249 = vmatprep.subr.mxu0 0.0
  %250 = vmatpush2.msra.mxu0 0.0
  %251 = vmatprep.subr.mxu0 0.0
  %252 = vmatpush2.msra.mxu0 0.0
  %253 = vmatprep.subr.mxu0 0.0
  %254 = vmatpush2.msra.mxu0 0.0
  %255 = vmatprep.subr.mxu0 0.0
  %256 = vmatpush2.msra.mxu0 0.0
  %257 = vmatprep.subr.mxu0 0.0
  %258 = vmatpush2.msra.mxu0 0.0
  %259 = vmatprep.subr.mxu0 0.0
  %260 = vmatpush2.msra.mxu0 0.0
  %261 = vmatprep.subr.mxu0 0.0
  %262 = vmatpush2.msra.mxu0 0.0
  %263 = vmatprep.subr.mxu0 0.0
  %264 = vmatpush2.msra.mxu0 0.0
  %265 = vmatprep.mubr.f32.mxu0 0.0
  %266 = vmatmul.mubr.f32.gmra.mxu0 %v199
  %v267 = vpop.f32.mrf.mxu0
  %v268 = vadd.f32 %v197, %v267
  %v269 = vpop.f32.mrf.mxu0
  %270 = vdwg.mxu0
  %vm271 = vcmask 23552
  %272 = vst.msk [vmem:[%s2] sm:$0xff] %vm271, %v268
  %v273 = vmax.f32 %v34, 0.0
  %v274 = vand.u32 2147483647, %v34
  %v275 = vsub.f32 0.0, %v274
  %v276 = vmul.f32 %v275, 1.442695
  %v277 = vpow.pop %v276
  %v278 = vadd.f32 %v277, 1.0
  %v279 = vlog2.pop %v278
  %v280 = vmul.f32 %v279, 0.6931472
  %v281 = vmul.f32 -0.5, %v277
  %v282 = vadd.f32 %v281, 1.0
  %v283 = vmul.f32 %v282, %v277
  %v284 = vand.u32 2147483647, %v277
  %vm285 = vcmp.lt.f32.partialorder %v284, 0.0004427343
  %v286 = vsel %vm285, %v283, %v280
  %v287 = vadd.f32 %v273, %v286
  %v288 = vlaneseq
  %v289 = vshrl.u32 %v288, 7
  %v290 = vsub.s32 0, %v289
  %v291 = vrot.slane %v287, %v290
  %292 = vst.msk [vmem:[%s3] sm:$0xff] %vm271, %v291
  // Predicated region
  $region10: #{actor_forward.1} parent=0 // pred_check
    _
  $region11: #{actor_forward.1} parent=0 // pred_check_branch
    %294 = sbr.rel (0) target = $region13
  $region12: #{actor_forward.1} parent=0 // pred_region
    _
  $region13: #{actor_forward.1} parent=0 // pred_fallthru
    _
  // Predicated region
  $region14: #{actor_forward.1} parent=0 // pred_check
    _
  $region15: #{actor_forward.1} parent=0 // pred_check_branch
    %296 = sbr.rel (0) target = $region17
  $region16: #{actor_forward.1} parent=0 // pred_region
    _
  $region17: #{actor_forward.1} parent=0 // pred_fallthru
    _
  // Predicated region
  $region18: #{actor_forward.1} parent=0 // pred_check
    _
  $region19: #{actor_forward.1} parent=0 // pred_check_branch
    %298 = sbr.rel (0) target = $region21
  $region20: #{actor_forward.1} parent=0 // pred_region
    _
  $region21: #{actor_forward.1} parent=0 // pred_fallthru
    _
  // Predicated region
  $region22: #{actor_forward.1} parent=0 // pred_check
    _
  $region23: #{actor_forward.1} parent=0 // pred_check_branch
    %300 = sbr.rel (0) target = $region25
  $region24: #{actor_forward.1} parent=0 // pred_region
    _
  $region25: #{actor_forward.1} parent=0 // pred_fallthru
    _

</llo_original>
